<compile_context>
chip_gen: v7x
topology: tpu7x:2x2x1
jax: 0.10.0
libtpu: 0.0.40
codegen_flags: <defaults>
</compile_context>

<pallas_src>
import functools

import jax
import jax.numpy as jnp
from jax import lax
from jax.experimental import pallas as pl
from jax.experimental.pallas import tpu as pltpu


def _pooled_logreg_kernel(
        prem_ids_ref, hyp_ids_ref, meta_ref,      # scalar-prefetch (SMEM)
        table_ref, wp_ref, wh_ref, bias_ref,      # operands (VMEM / SMEM)
        out_ref,                                  # output block (1, TB), VMEM
        *, seq_len):
    i = pl.program_id(0)
    tb = out_ref.shape[-1]
    emb_dim = table_ref.shape[-1]

    w_p = wp_ref[...]                 # (1, E)
    w_h = wh_ref[...]                 # (1, E)
    bias = bias_ref[0, 0]             # f32 scalar from SMEM

    batch = meta_ref[0]               # true (unpadded) batch size
    base = i * tb
    rows = jnp.minimum(tb, batch - base)    # valid rows in this batch block

    lane = lax.broadcasted_iota(jnp.int32, (1, tb), dimension=1)
    neg_inf = jnp.full((1, emb_dim), -jnp.inf, dtype=jnp.float32)

    def pool_row(ids_ref, row):
        # running max over the sequence of gathered embedding rows
        start = (base + row) * seq_len

        def body(l, acc):
            tok = ids_ref[start + l]
            return jnp.maximum(acc, table_ref[pl.ds(tok, 1), :])

        return lax.fori_loop(0, seq_len, body, neg_inf)          # (1, E)

    def row_body(r, logits):
        p_pool = pool_row(prem_ids_ref, r)                       # (1, E)
        h_pool = pool_row(hyp_ids_ref, r)                        # (1, E)
        # concat([p, h]) @ W.T  ==  sum(p * w_p) + sum(h * w_h)
        logit = (jnp.sum(p_pool * w_p, axis=-1, keepdims=True) +
                 jnp.sum(h_pool * w_h, axis=-1, keepdims=True))  # (1, 1)
        return jnp.where(lane == r, logit, logits)

    logits = lax.fori_loop(0, rows, row_body,
                           jnp.zeros((1, tb), dtype=jnp.float32))
    out_ref[...] = jax.nn.sigmoid(logits + bias)


def pooled_logreg_forward(premise, hypothesis, emb_table, weight, bias,
                          *, block_b=128):
    """premise/hypothesis: int [B, L]; emb_table: [V, E];
    weight: [1, 2E] (torch Linear layout); bias: [1]. Returns float32 [B]."""
    B, L = premise.shape
    V, E = emb_table.shape
    assert weight.shape == (1, 2 * E)

    num_blocks = pl.cdiv(B, block_b)
    b_pad = num_blocks * block_b

    def prep_ids(ids):
        ids = ids.astype(jnp.int32)
        if b_pad != B:
            ids = jnp.pad(ids, ((0, b_pad - B), (0, 0)))  # pad rows with token 0
        return ids.reshape(-1)        # flat 1-D => minimal SMEM padding

    prem_flat = prep_ids(premise)
    hyp_flat = prep_ids(hypothesis)
    meta = jnp.array([B], dtype=jnp.int32)

    w = weight.reshape(-1).astype(jnp.float32)
    w_p = w[:E].reshape(1, E)         # split the concat halves in the wrapper
    w_h = w[E:].reshape(1, E)
    bias_2d = jnp.asarray(bias, jnp.float32).reshape(1, 1)
    # f32 table keeps the max-pool on the plain VPU path on all of v5e/v6e/v7x;
    # it is DMA'd once (resident across the batch grid), so bandwidth is moot.
    # TODO(synk): for very large vocabularies the table won't fit VMEM; switch
    # it to memory_space=pl.ANY and DMA-gather rows manually.
    table = emb_table.astype(jnp.float32)

    kernel = functools.partial(_pooled_logreg_kernel, seq_len=L)

    grid_spec = pltpu.PrefetchScalarGridSpec(
        num_scalar_prefetch=3,        # premise ids, hypothesis ids, [B]
        grid=(num_blocks,),
        in_specs=[
            pl.BlockSpec((V, E), lambda i, p, h, m: (0, 0)),    # table, resident
            pl.BlockSpec((1, E), lambda i, p, h, m: (0, 0)),    # w_p, resident
            pl.BlockSpec((1, E), lambda i, p, h, m: (0, 0)),    # w_h, resident
            pl.BlockSpec(memory_space=pltpu.MemorySpace.SMEM),  # bias scalar
        ],
        out_specs=pl.BlockSpec((1, block_b), lambda i, p, h, m: (0, i)),
    )

    out = pl.pallas_call(
        kernel,
        out_shape=jax.ShapeDtypeStruct((1, b_pad), jnp.float32),
        grid_spec=grid_spec,
        compiler_params=pltpu.CompilerParams(
            dimension_semantics=("parallel",)),
    )(prem_flat, hyp_flat, meta, table, w_p, w_h, bias_2d)

    return out.reshape(-1)[:B]        # .squeeze()


def _reference(premise, hypothesis, emb_table, weight, bias):
    p = jnp.max(jnp.take(emb_table, premise, axis=0), axis=1)
    h = jnp.max(jnp.take(emb_table, hypothesis, axis=0), axis=1)
    x = jnp.concatenate([p, h], axis=1)
    logits = x @ weight.T + bias
    return jax.nn.sigmoid(logits).reshape(-1)


if __name__ == "__main__":
    key = jax.random.PRNGKey(0)
    k_emb, k_w, k_b, k_p, k_h = jax.random.split(key, 5)

    VOCAB = 64      # embedding num_embeddings
    E = 32          # embedding_dim (== hidden_size in the module)
    B = 2           # batch
    L = 8           # sequence length

    emb_table = jax.random.normal(k_emb, (VOCAB, E), dtype=jnp.float32)
    weight = jax.random.normal(k_w, (1, 2 * E), dtype=jnp.float32) * 0.1
    bias = jax.random.normal(k_b, (1,), dtype=jnp.float32) * 0.1

    premise = jax.random.randint(k_p, (B, L), 0, VOCAB, dtype=jnp.int32)
    hypothesis = jax.random.randint(k_h, (B, L), 0, VOCAB, dtype=jnp.int32)

    out = pooled_logreg_forward(premise, hypothesis, emb_table, weight, bias)
    out = jax.block_until_ready(out)
    ref = _reference(premise, hypothesis, emb_table, weight, bias)
    assert out.shape == (B,), out.shape
    assert jnp.allclose(out, ref, atol=1e-5, rtol=1e-5), (out, ref)

    # Multi-block path: batch larger than one 128-row block exercises the
    # parallel batch grid and the padded final block.
    B2 = 130
    k_p2, k_h2 = jax.random.split(k_p)
    premise2 = jax.random.randint(k_p2, (B2, L), 0, VOCAB, dtype=jnp.int32)
    hypothesis2 = jax.random.randint(k_h2, (B2, L), 0, VOCAB, dtype=jnp.int32)
    out2 = jax.block_until_ready(
        pooled_logreg_forward(premise2, hypothesis2, emb_table, weight, bias))
    ref2 = _reference(premise2, hypothesis2, emb_table, weight, bias)
    assert out2.shape == (B2,), out2.shape
    assert jnp.allclose(out2, ref2, atol=1e-5, rtol=1e-5)

    print("KERNEL_OK")
</pallas_src>

<mosaic_0001>
module attributes {stable_mosaic.version = 11 : i64} {
  func.func @_pooled_logreg_kernel(%arg0: i32, %arg1: memref<1024xi32, #tpu.memory_space<smem>>, %arg2: memref<1024xi32, #tpu.memory_space<smem>>, %arg3: memref<1xi32, #tpu.memory_space<smem>>, %arg4: memref<64x32xf32, #tpu.memory_space<vmem>>, %arg5: memref<1x32xf32, #tpu.memory_space<vmem>>, %arg6: memref<1x32xf32, #tpu.memory_space<vmem>>, %arg7: memref<1x1xf32, #tpu.memory_space<smem>>, %arg8: memref<1x128xf32, #tpu.memory_space<vmem>>) attributes {dimension_semantics = [#tpu.dimension_semantics<parallel>], iteration_bounds = array<i64: 1>, scalar_prefetch = 3 : i64, scratch_operands = 0 : i64, tpu.core_type = #tpu.core_type<tc>, window_params = [{pipeline_mode = #tpu.pipeline_mode<synchronous>, transform_indices = @transform_0, window_bounds = array<i64: 64, 32>}, {pipeline_mode = #tpu.pipeline_mode<synchronous>, transform_indices = @transform_1, window_bounds = array<i64: 1, 32>}, {pipeline_mode = #tpu.pipeline_mode<synchronous>, transform_indices = @transform_2, window_bounds = array<i64: 1, 32>}, {transform_indices = @transform_3, window_bounds = array<i64: 1, 1>}, {transform_indices = @transform_4, window_bounds = array<i64: 1, 128>}]} {
    %c0 = arith.constant 0 : index
    %c0_0 = arith.constant 0 : index
    %0 = vector.load %arg5[%c0, %c0_0] : memref<1x32xf32, #tpu.memory_space<vmem>>, vector<1x32xf32>
    %c0_1 = arith.constant 0 : index
    %c0_2 = arith.constant 0 : index
    %1 = vector.load %arg6[%c0_1, %c0_2] : memref<1x32xf32, #tpu.memory_space<vmem>>, vector<1x32xf32>
    %c0_3 = arith.constant 0 : index
    %c0_4 = arith.constant 0 : index
    %2 = memref.load %arg7[%c0_3, %c0_4] : memref<1x1xf32, #tpu.memory_space<smem>>
    %c0_5 = arith.constant 0 : index
    %3 = memref.load %arg3[%c0_5] : memref<1xi32, #tpu.memory_space<smem>>
    %c128_i32 = arith.constant 128 : i32
    %4 = arith.muli %arg0, %c128_i32 : i32
    %5 = arith.subi %3, %4 : i32
    %c128_i32_6 = arith.constant 128 : i32
    %6 = arith.minsi %c128_i32_6, %5 : i32
    %7 = tpu.iota {dimensions = array<i32: 1>} : vector<1x128xi32>
    %cst = arith.constant 0xFF800000 : f32
    %8 = vector.broadcast %cst : f32 to vector<1x32xf32>
    %cst_7 = arith.constant 0.000000e+00 : f32
    %9 = vector.broadcast %cst_7 : f32 to vector<1x128xf32>
    %c0_i32 = arith.constant 0 : i32
    %10 = arith.subi %6, %c0_i32 : i32
    %11 = arith.addi %c0_i32, %10 : i32
    %c1_i32 = arith.constant 1 : i32
    %12 = scf.for %arg9 = %c0_i32 to %11 step %c1_i32 iter_args(%arg10 = %9) -> (vector<1x128xf32>)  : i32 {
      %21 = arith.addi %4, %arg9 : i32
      %c8_i32 = arith.constant 8 : i32
      %22 = arith.muli %21, %c8_i32 : i32
      %c0_i32_11 = arith.constant 0 : i32
      %c8_i32_12 = arith.constant 8 : i32
      %23 = arith.addi %c0_i32_11, %c8_i32_12 : i32
      %c1_i32_13 = arith.constant 1 : i32
      %24 = scf.for %arg11 = %c0_i32_11 to %23 step %c1_i32_13 iter_args(%arg12 = %8) -> (vector<1x32xf32>)  : i32 {
        %41 = arith.addi %22, %arg11 : i32
        %42 = arith.index_cast %41 : i32 to index
        %43 = memref.load %arg1[%42] : memref<1024xi32, #tpu.memory_space<smem>>
        %44 = arith.index_cast %43 : i32 to index
        %c0_22 = arith.constant 0 : index
        %45 = vector.load %arg4[%44, %c0_22] : memref<64x32xf32, #tpu.memory_space<vmem>>, vector<1x32xf32>
        %46 = arith.maximumf %arg12, %45 : vector<1x32xf32>
        scf.yield %46 : vector<1x32xf32>
      }
      %c8_i32_14 = arith.constant 8 : i32
      %25 = arith.addi %4, %arg9 : i32
      %c8_i32_15 = arith.constant 8 : i32
      %26 = arith.muli %25, %c8_i32_15 : i32
      %c0_i32_16 = arith.constant 0 : i32
      %c8_i32_17 = arith.constant 8 : i32
      %27 = arith.addi %c0_i32_16, %c8_i32_17 : i32
      %c1_i32_18 = arith.constant 1 : i32
      %28 = scf.for %arg11 = %c0_i32_16 to %27 step %c1_i32_18 iter_args(%arg12 = %8) -> (vector<1x32xf32>)  : i32 {
        %41 = arith.addi %26, %arg11 : i32
        %42 = arith.index_cast %41 : i32 to index
        %43 = memref.load %arg2[%42] : memref<1024xi32, #tpu.memory_space<smem>>
        %44 = arith.index_cast %43 : i32 to index
        %c0_22 = arith.constant 0 : index
        %45 = vector.load %arg4[%44, %c0_22] : memref<64x32xf32, #tpu.memory_space<vmem>>, vector<1x32xf32>
        %46 = arith.maximumf %arg12, %45 : vector<1x32xf32>
        scf.yield %46 : vector<1x32xf32>
      }
      %c8_i32_19 = arith.constant 8 : i32
      %29 = arith.mulf %24, %0 : vector<1x32xf32>
      %cst_20 = arith.constant dense<0.000000e+00> : vector<1xf32>
      %30 = vector.multi_reduction <add>, %29, %cst_20 [1] : vector<1x32xf32> to vector<1xf32>
      %31 = vector.shape_cast %30 : vector<1xf32> to vector<1x1xf32>
      %32 = arith.mulf %28, %1 : vector<1x32xf32>
      %cst_21 = arith.constant dense<0.000000e+00> : vector<1xf32>
      %33 = vector.multi_reduction <add>, %32, %cst_21 [1] : vector<1x32xf32> to vector<1xf32>
      %34 = vector.shape_cast %33 : vector<1xf32> to vector<1x1xf32>
      %35 = arith.addf %31, %34 : vector<1x1xf32>
      %36 = vector.broadcast %arg9 : i32 to vector<1x128xi32>
      %37 = arith.cmpi eq, %7, %36 : vector<1x128xi32>
      %38 = vector.shape_cast %35 : vector<1x1xf32> to vector<1x1xf32>
      %39 = vector.broadcast %38 : vector<1x1xf32> to vector<1x128xf32>
      %40 = arith.select %37, %39, %arg10 : vector<1x128xi1>, vector<1x128xf32>
      scf.yield %40 : vector<1x128xf32>
    }
    %13 = vector.broadcast %2 : f32 to vector<1x128xf32>
    %14 = arith.addf %12, %13 : vector<1x128xf32>
    %15 = arith.negf %14 : vector<1x128xf32>
    %16 = math.exp %15 : vector<1x128xf32>
    %cst_8 = arith.constant 1.000000e+00 : f32
    %17 = vector.broadcast %cst_8 : f32 to vector<1x128xf32>
    %18 = arith.addf %17, %16 : vector<1x128xf32>
    %19 = arith.divf %17, %18 : vector<1x128xf32>
    %c0_9 = arith.constant 0 : index
    %c0_10 = arith.constant 0 : index
    %20 = vector.load %arg8[%c0_9, %c0_10] : memref<1x128xf32, #tpu.memory_space<vmem>>, vector<1x128xf32>
    tpu.vector_store %arg8[%c0_9, %c0_10], %19 {strides = array<i32>} : memref<1x128xf32, #tpu.memory_space<vmem>>, vector<1x128xf32>,
    return
  }
  func.func @transform_0(%arg0: i32, %arg1: memref<1024xi32, #tpu.memory_space<smem>>, %arg2: memref<1024xi32, #tpu.memory_space<smem>>, %arg3: memref<1xi32, #tpu.memory_space<smem>>) -> (i32, i32) {
    %c0_i32 = arith.constant 0 : i32
    %c0_i32_0 = arith.constant 0 : i32
    %c0_i32_1 = arith.constant 0 : i32
    return %c0_i32, %c0_i32_0 : i32, i32
  }
  func.func @transform_1(%arg0: i32, %arg1: memref<1024xi32, #tpu.memory_space<smem>>, %arg2: memref<1024xi32, #tpu.memory_space<smem>>, %arg3: memref<1xi32, #tpu.memory_space<smem>>) -> (i32, i32) {
    %c0_i32 = arith.constant 0 : i32
    %c0_i32_0 = arith.constant 0 : i32
    %c0_i32_1 = arith.constant 0 : i32
    return %c0_i32, %c0_i32_0 : i32, i32
  }
  func.func @transform_2(%arg0: i32, %arg1: memref<1024xi32, #tpu.memory_space<smem>>, %arg2: memref<1024xi32, #tpu.memory_space<smem>>, %arg3: memref<1xi32, #tpu.memory_space<smem>>) -> (i32, i32) {
    %c0_i32 = arith.constant 0 : i32
    %c0_i32_0 = arith.constant 0 : i32
    %c0_i32_1 = arith.constant 0 : i32
    return %c0_i32, %c0_i32_0 : i32, i32
  }
  func.func @transform_3(%arg0: i32, %arg1: memref<1024xi32, #tpu.memory_space<smem>>, %arg2: memref<1024xi32, #tpu.memory_space<smem>>, %arg3: memref<1xi32, #tpu.memory_space<smem>>) -> (i32, i32) {
    %c0_i32 = arith.constant 0 : i32
    %c0_i32_0 = arith.constant 0 : i32
    %c0_i32_1 = arith.constant 0 : i32
    return %c0_i32, %c0_i32_0 : i32, i32
  }
  func.func @transform_4(%arg0: i32, %arg1: memref<1024xi32, #tpu.memory_space<smem>>, %arg2: memref<1024xi32, #tpu.memory_space<smem>>, %arg3: memref<1xi32, #tpu.memory_space<smem>>) -> (i32, i32) {
    %c0_i32 = arith.constant 0 : i32
    %c0_i32_0 = arith.constant 0 : i32
    return %c0_i32, %arg0 : i32, i32
  }
}

</mosaic_0001>

<llo_original>
// kernel: tpu_custom_call.1
$region0: #{tpu_custom_call.1}
  #allocation0 [shape = 'u32[]', space=smem, size = 0x4, offset = 0x4, fixed_abs, tag = 'smem constant byte address 0x4 - core index']
  #allocation1 [shape = 'u32[144,128]{1,0:T(1,128)}', space=vmem, size = 0x12000, scoped, tag = 'internal scratch']
  #allocation2 [shape = 's32[1]{0}', space=sflag, size = 0x4, scoped, tag = 'scoped memory for tpu_custom_call.1']
  #allocation3 [shape = 'u8[4096]{0}', space=smem, size = 0x1000, scoped, tag = 'prefetched SMEM operand 0']
  #allocation4 [shape = 'u8[4096]{0}', space=smem, size = 0x1000, scoped, tag = 'prefetched SMEM operand 1']
  #allocation5 [shape = 's32[1]{0:T(128)S(6)}', space=smem, size = 0x200, scoped, tag = 'prefetched SMEM operand 2']
  #allocation6 [shape = 'f32[1,1]{1,0:T(1,128)S(6)}', space=smem, size = 0x200, scoped, tag = 'scoped memory for tpu_custom_call.1']
  %s0 = inlined_call_operand.vmem [shape: s32[1024], index: 0, kind: input, shape index: {}]
  %s1 = inlined_call_operand.vmem [shape: s32[1024], index: 1, kind: input, shape index: {}]
  %s2 = inlined_call_operand.<no memory space> [shape: s32[1], index: 2, kind: input, shape index: {}]
  %s3 = inlined_call_operand.vmem [shape: f32[64,32], index: 3, kind: input, shape index: {}]
  %s4 = inlined_call_operand.vmem [shape: f32[1,32], index: 4, kind: input, shape index: {}]
  %s5 = inlined_call_operand.vmem [shape: f32[1,32], index: 5, kind: input, shape index: {}]
  %s6 = inlined_call_operand.<no memory space> [shape: f32[1,1], index: 6, kind: input, shape index: {}]
  %s7 = inlined_call_operand.hbm [shape: f32[1,128], index: 7, kind: output, shape index: {}]
  %s8 = sld [smem:[#allocation0]]
  $region47: #{tpu_custom_call.1} parent=0
    _
  %s10 = ssub.s32 1, %s8
  %s11 = scalar_select 0, %s10, %s8
  %s12 = sshll.u32 %s0, 4
  %s13 = int_to_ptr.vmem [resolvable:$true] %s12
  %15 = dma.vmem_to_smem %s13, 128, [#allocation3], [#allocation2]
  %s16 = sshll.u32 %s1, 4
  %s17 = int_to_ptr.vmem [resolvable:$true] %s16
  %19 = dma.vmem_to_smem %s17, 128, [#allocation4], [#allocation2]
  %20 = sst [smem:[#allocation5]] %s2
  %21 = sst [smem:[#allocation6]] %s6
  %22 = dma.done [#allocation2], 256
  %23 = sfence
  $region1: #{tpu_custom_call.1} parent=0
    #allocation7 [shape = 'u8[512]{0}', space=vmem, size = 0x400, scoped, tag = 'output window, operand 0, single buffered']
    #allocation8 [shape = 's32[1]{0}', space=sflag, size = 0x4, scoped, tag = 'scoped memory for tpu_custom_call.1']
    %24 = vsyncpa [#allocation8], 0
    // Predicated region
    $region2: #{tpu_custom_call.1} parent=1 // pred_check
      _
    $region3: #{tpu_custom_call.1} parent=1 // pred_check_branch
      %26 = sbr.rel (0) target = $region5
    $region4: #{tpu_custom_call.1} parent=1 // pred_region
      _
    $region5: #{tpu_custom_call.1} parent=1 // pred_fallthru
      _
    // Predicated region
    $region6: #{tpu_custom_call.1} parent=1 // pred_check
      _
    $region7: #{tpu_custom_call.1} parent=1 // pred_check_branch
      %28 = sbr.rel (0) target = $region9
    $region8: #{tpu_custom_call.1} parent=1 // pred_region
      _
    $region9: #{tpu_custom_call.1} parent=1 // pred_fallthru
      _
    // Predicated region
    $region10: #{tpu_custom_call.1} parent=1 // pred_check
      _
    $region11: #{tpu_custom_call.1} parent=1 // pred_check_branch
      %30 = sbr.rel (0) target = $region13
    $region12: #{tpu_custom_call.1} parent=1 // pred_region
      _
    $region13: #{tpu_custom_call.1} parent=1 // pred_fallthru
      _
    // Predicated region
    $region14: #{tpu_custom_call.1} parent=1 // pred_check
      _
    $region15: #{tpu_custom_call.1} parent=1 // pred_check_branch
      %32 = sbr.rel (0) target = $region17
    $region16: #{tpu_custom_call.1} parent=1 // pred_region
      _
    $region17: #{tpu_custom_call.1} parent=1 // pred_fallthru
      _
    %v33 = vld [vmem:[%s4] sm:$0x1]
    %v34 = vld [vmem:[%s5] sm:$0x1]
    %s35 = sld [smem:[#allocation6]]
    %s36 = sld [smem:[#allocation5]]
    %s37 = smul.u32 0, 128
    %s38 = ssub.s32 %s36, %s37
    %p39 = scmp.lt.s32.totalorder %s38, 128
    %s40 = scalar_select %p39, %s38, 128
    %v41 = vlaneseq
    %v42 = vand.u32 %v41, 127
    // While loop
    $region18: #{tpu_custom_call.1} parent=1 // loop_pre_header
      _
    $region19: #{tpu_custom_call.1} parent=1 // loop_header
      %s44 = sphi 0, %s46
      %p45 = scmp.ge.s32.totalorder %s44, %s40
      %v49 = vphi 0.0, %v88
    $region20: #{tpu_custom_call.1} parent=1 // loop_header_branch
      %48 = sbr.rel (%p45) target = $region24
    $region21: #{tpu_custom_call.1} parent=1 // loop_body
      %s50 = sadd.s32 %s37, %s44
      %s51 = smul.u32 %s50, 8
      loop: start=0, step=1, limit=8
      $region25: #{tpu_custom_call.1} parent=21 // loop_pre_header
        _
      $region26: #{tpu_custom_call.1} parent=21 // loop_header
        %s53 = sphi 0, %s57
        %p54 = scmp.ge.s32.totalorder %s53, 8
        %v58 = vphi -inf, %v63
      $region27: #{tpu_custom_call.1} parent=21 // loop_header_branch
        %56 = sbr.rel (%p54) target = $region31
      $region28: #{tpu_custom_call.1} parent=21 // loop_body
        %s59 = sadd.s32 %s51, %s53
        %s60 = sld [smem:[#allocation3 + %s59]]
        %s61 = scalar_lea.vmem %s3, %s60
        %v62 = vld [vmem:[%s61] sm:$0x1]
        %v63 = vmax.f32 %v58, %v62
      $region29: #{tpu_custom_call.1} parent=21 // loop_footer
        %s57 = sadd.s32 1, %s53
      $region30: #{tpu_custom_call.1} parent=21 // loop_footer_branch
        %52 = sbr.rel target = $region26
      $region31: #{tpu_custom_call.1} parent=21 // loop_exit
        _
      loop: start=0, step=1, limit=8
      $region32: #{tpu_custom_call.1} parent=21 // loop_pre_header
        _
      $region33: #{tpu_custom_call.1} parent=21 // loop_header
        %s65 = sphi 0, %s69
        %p66 = scmp.ge.s32.totalorder %s65, 8
        %v70 = vphi -inf, %v75
      $region34: #{tpu_custom_call.1} parent=21 // loop_header_branch
        %68 = sbr.rel (%p66) target = $region38
      $region35: #{tpu_custom_call.1} parent=21 // loop_body
        %s71 = sadd.s32 %s51, %s65
        %s72 = sld [smem:[#allocation4 + %s71]]
        %s73 = scalar_lea.vmem %s3, %s72
        %v74 = vld [vmem:[%s73] sm:$0x1]
        %v75 = vmax.f32 %v70, %v74
      $region36: #{tpu_custom_call.1} parent=21 // loop_footer
        %s69 = sadd.s32 1, %s65
      $region37: #{tpu_custom_call.1} parent=21 // loop_footer_branch
        %64 = sbr.rel target = $region33
      $region38: #{tpu_custom_call.1} parent=21 // loop_exit
        _
      %v76 = vmul.f32 %v58, %v33
      %vm77 = vcmask 253952
      %v78 = vsel %vm77, %v76, 0.0
      %79 = vadd.xlane.f32.xlu0 %v78
      %v80 = vpop.xlane.xlu0 %79
      %v81 = vmul.f32 %v70, %v34
      %v82 = vsel %vm77, %v81, 0.0
      %83 = vadd.xlane.f32.xlu0 %v82
      %v84 = vpop.xlane.xlu0 %83
      %v85 = vadd.f32 %v80, %v84
      %v86 = vstv %s44
      %vm87 = vcmp.eq.s32.totalorder %v42, %v86
      %v88 = vsel %vm87, %v85, %v49
    $region22: #{tpu_custom_call.1} parent=1 // loop_footer
      %s46 = sadd.s32 %s44, 1
    $region23: #{tpu_custom_call.1} parent=1 // loop_footer_branch
      %43 = sbr.rel target = $region19
    $region24: #{tpu_custom_call.1} parent=1 // loop_exit
      _
    %v89 = vstv %s35
    %v90 = vadd.f32 %v49, %v89
    %v91 = vxor.u32 %v90, 2147483648
    %v92 = vmul.f32 %v91, 1.442695
    %v93 = vpow.pop %v92
    %v94 = vadd.f32 %v93, 1.0
    %v95 = vrcp.pop %v94
    %v96 = vmul.f32 1.0, %v95
    %97 = vst [vmem:[#allocation7] sm:$0x1] %v96
    // Predicated region
    $region39: #{tpu_custom_call.1} parent=1 // pred_check
      _
    $region40: #{tpu_custom_call.1} parent=1 // pred_check_branch
      %99 = sbr.rel (0) target = $region42
    $region41: #{tpu_custom_call.1} parent=1 // pred_region
      %s101 = ssub.s32 16, 16
      %102 = vsyncadd [#allocation8], %s101
      %s104 = sshll.u32 [#allocation7], 4
      %s105 = int_to_ptr.vmem [resolvable:$true] %s104
      %107 = dma.vmem_to_hbm [thread:$0]  %s105, 16, %s7, [#allocation8]
    $region42: #{tpu_custom_call.1} parent=1 // pred_fallthru
      _
    // Predicated region
    $region43: #{tpu_custom_call.1} parent=1 // pred_check
      _
    $region44: #{tpu_custom_call.1} parent=1 // pred_check_branch
      %109 = sbr.rel (0) target = $region46
    $region45: #{tpu_custom_call.1} parent=1 // pred_region
      %110 = dma.done [#allocation8], 16
    $region46: #{tpu_custom_call.1} parent=1 // pred_fallthru
      _
    %111 = vsyncpa [#allocation8], 1

</llo_original>
